<compile_context>
chip_gen: v6e
topology: v6e:2x2x1
jax: 0.10.0
libtpu: 0.0.40
codegen_flags: <defaults>
</compile_context>

<pallas_src>
import functools

import jax
import jax.numpy as jnp
from jax import lax
from jax.experimental import pallas as pl
from jax.experimental.pallas import tpu as pltpu


def fusion_kernel(x_ref, y_ref, w1x_ref, w1y_ref, b1_ref, w2d_ref,
                  out_ref, fw_ref, *, thr):
    """One batch tile: hard (straight-through) softmax fusion of x and y."""
    x = x_ref[...]                                    # (TB, D) f32
    y = y_ref[...]                                    # (TB, D) f32

    # Linear1 on cat([x, y]) without an in-kernel concat.
    h = (jnp.dot(x.astype(jnp.bfloat16), w1x_ref[...],
                 preferred_element_type=jnp.float32)
         + jnp.dot(y.astype(jnp.bfloat16), w1y_ref[...],
                   preferred_element_type=jnp.float32)
         + b1_ref[...])                               # (TB, H) f32
    h = jnp.maximum(h, 0.0)                           # ReLU

    # 2-class softmax followed by (p > 0.5) == sign test on the logit difference.
    s = jnp.sum(h * w2d_ref[...], axis=-1, keepdims=True)    # (TB, 1) f32
    pos = s > thr                                     # hard weight on x
    neg = s < thr                                     # hard weight on y

    # f_weight = [pos, neg] as float, built with elementwise ops only.
    col = lax.broadcasted_iota(jnp.int32, fw_ref.shape, 1)   # (TB, 2)
    fw_ref[...] = jnp.where(col == 0,
                            pos.astype(jnp.float32),
                            neg.astype(jnp.float32))

    # f_out = fw0 * x + fw1 * y  ->  select on the sign test.
    out_ref[...] = jnp.where(pos, x, jnp.where(neg, y, jnp.zeros_like(x)))


def _vmem_capacity_bytes():
    """Physical per-core VMEM for this generation; conservative v7x fallback."""
    try:
        return int(pltpu.get_tpu_info().vmem_capacity_bytes)
    except Exception:
        return 64 * 1024 * 1024


def _pick_batch_tile(B, D, H, requested_tb, vmem_cap):
    """Largest batch tile that fits the VMEM budget; >= 2 tiles when possible."""
    per_row = 2 * (3 * D + 2) * 4                    # double-buffered x/y/out/fw bytes / row
    weight_bytes = 2 * (2 * D * H * 2 + 2 * H * 4)   # resident weights (worst case 2 bufs)
    budget = (3 * vmem_cap) // 4 - weight_bytes - (4 << 20)
    tb = min(int(requested_tb), max(8, budget // per_row))
    if B > 8:
        tb = min(tb, (B + 1) // 2)   # >= 2 grid steps so both v7x TensorCores get work
    return max(8, (tb // 8) * 8)


def gumbel_softmax_fusion(x, y, params, *, tb=1024):
    """Returns (x_out, y_out, f_weight) like the PyTorch module (x_out is y_out).

    `params` = (w1x_bf16, w1y_bf16, b1, w2_diff, thr) from init_params; `thr`
    must be a concrete Python float (it is baked into the kernel).
    """
    w1x, w1y, b1, w2d, thr = params
    B, D = x.shape
    H = w1x.shape[1]

    vmem_cap = _vmem_capacity_bytes()
    tb = _pick_batch_tile(B, D, H, tb, vmem_cap)

    pad = (-B) % tb
    if pad:
        x = jnp.pad(x, ((0, pad), (0, 0)))
        y = jnp.pad(y, ((0, pad), (0, 0)))
    Bp = B + pad
    grid = (Bp // tb,)

    # Only raise the scoped-VMEM limit when this call actually needs more than
    # the smallest compiler default (16 MiB on v5e); cap at 85% of physical VMEM
    # so Mosaic keeps headroom for internal scratch.
    tile_bytes = 2 * tb * (3 * D + 2) * 4            # double-buffered x/y/out/fw tiles
    weight_bytes = 2 * (2 * D * H * 2 + 2 * H * 4)   # resident weights, worst case 2 bufs
    vmem_need = tile_bytes + weight_bytes + (4 << 20)
    vmem_limit = None if vmem_need <= (16 << 20) else int(
        min(vmem_need, (85 * vmem_cap) // 100))

    batch_spec = pl.BlockSpec((tb, D), lambda i: (i, 0))
    kernel = functools.partial(fusion_kernel, thr=float(thr))

    out, fw = pl.pallas_call(
        kernel,
        grid=grid,
        in_specs=[
            batch_spec,                                   # x tile
            batch_spec,                                   # y tile
            pl.BlockSpec((D, H), lambda i: (0, 0)),       # W1 x-half (bf16, resident)
            pl.BlockSpec((D, H), lambda i: (0, 0)),       # W1 y-half (bf16, resident)
            pl.BlockSpec((1, H), lambda i: (0, 0)),       # b1
            pl.BlockSpec((1, H), lambda i: (0, 0)),       # w2[:,0] - w2[:,1]
        ],
        out_specs=(
            pl.BlockSpec((tb, D), lambda i: (i, 0)),      # fused feature
            pl.BlockSpec((tb, 2), lambda i: (i, 0)),      # hard fusion weights
        ),
        out_shape=(
            jax.ShapeDtypeStruct((Bp, D), jnp.float32),
            jax.ShapeDtypeStruct((Bp, 2), jnp.float32),
        ),
        compiler_params=pltpu.CompilerParams(
            dimension_semantics=("parallel",),
            vmem_limit_bytes=vmem_limit,
        ),
        cost_estimate=pl.CostEstimate(
            flops=4 * Bp * D * H + 3 * Bp * H,
            transcendentals=0,
            bytes_accessed=3 * Bp * D * 4 + Bp * 2 * 4 + 2 * D * H * 2 + 8 * H,
        ),
    )(x, y, w1x, w1y, b1, w2d)

    if pad:
        out = out[:B]
        fw = fw[:B]
    return out, out, fw


def init_params(key, d_in, hidden):
    """PyTorch-Linear-style uniform init.  Returns (kernel params, full params)."""
    k1, k2, k3, k4 = jax.random.split(key, 4)
    fan1 = 2 * d_in
    lim1 = 1.0 / (fan1 ** 0.5)
    w1 = jax.random.uniform(k1, (fan1, hidden), jnp.float32, -lim1, lim1)
    b1 = jax.random.uniform(k2, (1, hidden), jnp.float32, -lim1, lim1)
    lim2 = 1.0 / (hidden ** 0.5)
    w2 = jax.random.uniform(k3, (hidden, 2), jnp.float32, -lim2, lim2)
    b2 = jax.random.uniform(k4, (1, 2), jnp.float32, -lim2, lim2)

    w1x = w1[:d_in].astype(jnp.bfloat16)               # x-half of W1
    w1y = w1[d_in:].astype(jnp.bfloat16)               # y-half of W1
    w2d = (w2[:, 0] - w2[:, 1]).reshape(1, hidden)     # logit-difference weights
    thr = float(b2[0, 1] - b2[0, 0])                   # decision threshold (static scalar)
    kernel_params = (w1x, w1y, b1, w2d, thr)
    full_params = (w1, b1, w2, b2)
    return kernel_params, full_params


def reference(x, y, full_params):
    """Pure-JAX reference of the PyTorch forward (bf16 first matmul to mirror the
    kernel's MXU precision).  Also returns the soft probabilities for the test."""
    w1, b1, w2, b2 = full_params
    f_in = jnp.concatenate([x, y], axis=-1)
    h = jnp.maximum(
        jnp.dot(f_in.astype(jnp.bfloat16), w1.astype(jnp.bfloat16),
                preferred_element_type=jnp.float32) + b1, 0.0)
    logits = jnp.dot(h, w2) + b2
    p = jax.nn.softmax(logits, axis=-1)
    fw = (p > 0.5).astype(jnp.float32)
    f_out = fw[:, 0:1] * x + fw[:, 1:2] * y
    return f_out, f_out, fw, p


if __name__ == "__main__":
    B, D, H = 32, 128, 128          # batch, per-input feature dim, hidden dim
    key = jax.random.PRNGKey(0)
    kx, ky, kp = jax.random.split(key, 3)
    x = jax.random.normal(kx, (B, D), jnp.float32)
    y = jax.random.normal(ky, (B, D), jnp.float32)
    kernel_params, full_params = init_params(kp, D, H)

    # The tile picker clamps tb to 16 here -> a 2-step grid, exercising both the
    # pipelined path and the >=2-tile (v7x megacore) clamp.
    x_out, y_out, f_weight = gumbel_softmax_fusion(x, y, kernel_params)
    jax.block_until_ready((x_out, y_out, f_weight))

    # Self-consistency: fused output must equal the hard-weight mix of x / y.
    recomb = f_weight[:, 0:1] * x + f_weight[:, 1:2] * y
    assert jnp.array_equal(x_out, recomb), "x_out inconsistent with f_weight"

    # Cross-check against the pure-JAX softmax reference.  Rows whose soft weight
    # is essentially a tie are excluded (bf16 matmul reduction order differs
    # slightly between the MXU kernel and XLA; ties are ambiguous by definition).
    rx, _, rf, rp = reference(x, y, full_params)
    decisive = jnp.abs(rp[:, :1] - 0.5) > 1e-3           # (B, 1)
    assert bool(jnp.all(jnp.where(decisive, f_weight == rf, True))), \
        "f_weight mismatch vs softmax reference"
    assert bool(jnp.all(jnp.where(decisive, jnp.abs(x_out - rx) < 1e-5, True))), \
        "x_out mismatch vs softmax reference"

    print("KERNEL_OK")
</pallas_src>

<mosaic_0001>
module attributes {stable_mosaic.version = 11 : i64} {
  func.func @fusion_kernel(%arg0: i32, %arg1: memref<16x128xf32, #tpu.memory_space<vmem>>, %arg2: memref<16x128xf32, #tpu.memory_space<vmem>>, %arg3: memref<128x128xbf16, #tpu.memory_space<vmem>>, %arg4: memref<128x128xbf16, #tpu.memory_space<vmem>>, %arg5: memref<1x128xf32, #tpu.memory_space<vmem>>, %arg6: memref<1x128xf32, #tpu.memory_space<vmem>>, %arg7: memref<16x128xf32, #tpu.memory_space<vmem>>, %arg8: memref<16x2xf32, #tpu.memory_space<vmem>>) attributes {dimension_semantics = [#tpu.dimension_semantics<parallel>], iteration_bounds = array<i64: 2>, scalar_prefetch = 0 : i64, scratch_operands = 0 : i64, tpu.core_type = #tpu.core_type<tc>, window_params = [{transform_indices = @transform_0, window_bounds = array<i64: 16, 128>}, {transform_indices = @transform_1, window_bounds = array<i64: 16, 128>}, {pipeline_mode = #tpu.pipeline_mode<synchronous>, transform_indices = @transform_2, window_bounds = array<i64: 128, 128>}, {pipeline_mode = #tpu.pipeline_mode<synchronous>, transform_indices = @transform_3, window_bounds = array<i64: 128, 128>}, {pipeline_mode = #tpu.pipeline_mode<synchronous>, transform_indices = @transform_4, window_bounds = array<i64: 1, 128>}, {pipeline_mode = #tpu.pipeline_mode<synchronous>, transform_indices = @transform_5, window_bounds = array<i64: 1, 128>}, {transform_indices = @transform_6, window_bounds = array<i64: 16, 128>}, {transform_indices = @transform_7, window_bounds = array<i64: 16, 2>}]} {
    %c0 = arith.constant 0 : index
    %c0_0 = arith.constant 0 : index
    %0 = vector.load %arg1[%c0, %c0_0] : memref<16x128xf32, #tpu.memory_space<vmem>>, vector<16x128xf32>
    %c0_1 = arith.constant 0 : index
    %c0_2 = arith.constant 0 : index
    %1 = vector.load %arg2[%c0_1, %c0_2] : memref<16x128xf32, #tpu.memory_space<vmem>>, vector<16x128xf32>
    %2 = arith.truncf %0 : vector<16x128xf32> to vector<16x128xbf16>
    %c0_3 = arith.constant 0 : index
    %c0_4 = arith.constant 0 : index
    %3 = vector.load %arg3[%c0_3, %c0_4] : memref<128x128xbf16, #tpu.memory_space<vmem>>, vector<128x128xbf16>
    %cst = arith.constant dense<0.000000e+00> : vector<16x128xf32>
    %4 = tpu.matmul %2, %3, %cst {dimension_numbers = #tpu.dot_dimension_numbers<[1], [0], [0], [1], [0, 0, 1, 1], [], []>} : vector<16x128xbf16>, vector<128x128xbf16>, vector<16x128xf32> -> vector<16x128xf32>
    %5 = arith.truncf %1 : vector<16x128xf32> to vector<16x128xbf16>
    %c0_5 = arith.constant 0 : index
    %c0_6 = arith.constant 0 : index
    %6 = vector.load %arg4[%c0_5, %c0_6] : memref<128x128xbf16, #tpu.memory_space<vmem>>, vector<128x128xbf16>
    %cst_7 = arith.constant dense<0.000000e+00> : vector<16x128xf32>
    %7 = tpu.matmul %5, %6, %cst_7 {dimension_numbers = #tpu.dot_dimension_numbers<[1], [0], [0], [1], [0, 0, 1, 1], [], []>} : vector<16x128xbf16>, vector<128x128xbf16>, vector<16x128xf32> -> vector<16x128xf32>
    %8 = arith.addf %4, %7 : vector<16x128xf32>
    %c0_8 = arith.constant 0 : index
    %c0_9 = arith.constant 0 : index
    %9 = vector.load %arg5[%c0_8, %c0_9] : memref<1x128xf32, #tpu.memory_space<vmem>>, vector<1x128xf32>
    %10 = vector.broadcast %9 : vector<1x128xf32> to vector<16x128xf32>
    %11 = arith.addf %8, %10 : vector<16x128xf32>
    %cst_10 = arith.constant 0.000000e+00 : f32
    %12 = vector.broadcast %cst_10 : f32 to vector<16x128xf32>
    %13 = arith.maximumf %11, %12 : vector<16x128xf32>
    %c0_11 = arith.constant 0 : index
    %c0_12 = arith.constant 0 : index
    %14 = vector.load %arg6[%c0_11, %c0_12] : memref<1x128xf32, #tpu.memory_space<vmem>>, vector<1x128xf32>
    %15 = vector.broadcast %14 : vector<1x128xf32> to vector<16x128xf32>
    %16 = arith.mulf %13, %15 : vector<16x128xf32>
    %cst_13 = arith.constant dense<0.000000e+00> : vector<16xf32>
    %17 = vector.multi_reduction <add>, %16, %cst_13 [1] : vector<16x128xf32> to vector<16xf32>
    %18 = vector.shape_cast %17 : vector<16xf32> to vector<16x1xf32>
    %cst_14 = arith.constant 0.062442068 : f32
    %19 = vector.broadcast %cst_14 : f32 to vector<16x1xf32>
    %20 = arith.cmpf ogt, %18, %19 : vector<16x1xf32>
    %cst_15 = arith.constant 0.062442068 : f32
    %21 = vector.broadcast %cst_15 : f32 to vector<16x1xf32>
    %22 = arith.cmpf olt, %18, %21 : vector<16x1xf32>
    %23 = tpu.iota {dimensions = array<i32: 1>} : vector<16x2xi32>
    %c0_i32 = arith.constant 0 : i32
    %24 = vector.broadcast %c0_i32 : i32 to vector<16x2xi32>
    %25 = arith.cmpi eq, %23, %24 : vector<16x2xi32>
    %26 = arith.extui %20 : vector<16x1xi1> to vector<16x1xi32>
    %27 = arith.sitofp %26 : vector<16x1xi32> to vector<16x1xf32>
    %28 = arith.extui %22 : vector<16x1xi1> to vector<16x1xi32>
    %29 = arith.sitofp %28 : vector<16x1xi32> to vector<16x1xf32>
    %30 = vector.shape_cast %27 : vector<16x1xf32> to vector<16x1xf32>
    %31 = vector.broadcast %30 : vector<16x1xf32> to vector<16x2xf32>
    %32 = vector.shape_cast %29 : vector<16x1xf32> to vector<16x1xf32>
    %33 = vector.broadcast %32 : vector<16x1xf32> to vector<16x2xf32>
    %34 = arith.select %25, %31, %33 : vector<16x2xi1>, vector<16x2xf32>
    %c0_16 = arith.constant 0 : index
    %c0_17 = arith.constant 0 : index
    %35 = vector.load %arg8[%c0_16, %c0_17] : memref<16x2xf32, #tpu.memory_space<vmem>>, vector<16x2xf32>
    tpu.vector_store %arg8[%c0_16, %c0_17], %34 {strides = array<i32>} : memref<16x2xf32, #tpu.memory_space<vmem>>, vector<16x2xf32>,
    %cst_18 = arith.constant 0.000000e+00 : f32
    %36 = vector.broadcast %cst_18 : f32 to vector<16x128xf32>
    %37 = vector.shape_cast %22 : vector<16x1xi1> to vector<16x1xi1>
    %38 = vector.broadcast %37 : vector<16x1xi1> to vector<16x128xi1>
    %39 = arith.select %38, %1, %36 : vector<16x128xi1>, vector<16x128xf32>
    %40 = vector.shape_cast %20 : vector<16x1xi1> to vector<16x1xi1>
    %41 = vector.broadcast %40 : vector<16x1xi1> to vector<16x128xi1>
    %42 = arith.select %41, %0, %39 : vector<16x128xi1>, vector<16x128xf32>
    %c0_19 = arith.constant 0 : index
    %c0_20 = arith.constant 0 : index
    %43 = vector.load %arg7[%c0_19, %c0_20] : memref<16x128xf32, #tpu.memory_space<vmem>>, vector<16x128xf32>
    tpu.vector_store %arg7[%c0_19, %c0_20], %42 {strides = array<i32>} : memref<16x128xf32, #tpu.memory_space<vmem>>, vector<16x128xf32>,
    return
  }
  func.func @transform_0(%arg0: i32) -> (i32, i32) {
    %c0_i32 = arith.constant 0 : i32
    %c0_i32_0 = arith.constant 0 : i32
    return %arg0, %c0_i32 : i32, i32
  }
  func.func @transform_1(%arg0: i32) -> (i32, i32) {
    %c0_i32 = arith.constant 0 : i32
    %c0_i32_0 = arith.constant 0 : i32
    return %arg0, %c0_i32 : i32, i32
  }
  func.func @transform_2(%arg0: i32) -> (i32, i32) {
    %c0_i32 = arith.constant 0 : i32
    %c0_i32_0 = arith.constant 0 : i32
    %c0_i32_1 = arith.constant 0 : i32
    return %c0_i32, %c0_i32_0 : i32, i32
  }
  func.func @transform_3(%arg0: i32) -> (i32, i32) {
    %c0_i32 = arith.constant 0 : i32
    %c0_i32_0 = arith.constant 0 : i32
    %c0_i32_1 = arith.constant 0 : i32
    return %c0_i32, %c0_i32_0 : i32, i32
  }
  func.func @transform_4(%arg0: i32) -> (i32, i32) {
    %c0_i32 = arith.constant 0 : i32
    %c0_i32_0 = arith.constant 0 : i32
    %c0_i32_1 = arith.constant 0 : i32
    return %c0_i32, %c0_i32_0 : i32, i32
  }
  func.func @transform_5(%arg0: i32) -> (i32, i32) {
    %c0_i32 = arith.constant 0 : i32
    %c0_i32_0 = arith.constant 0 : i32
    %c0_i32_1 = arith.constant 0 : i32
    return %c0_i32, %c0_i32_0 : i32, i32
  }
  func.func @transform_6(%arg0: i32) -> (i32, i32) {
    %c0_i32 = arith.constant 0 : i32
    %c0_i32_0 = arith.constant 0 : i32
    return %arg0, %c0_i32 : i32, i32
  }
  func.func @transform_7(%arg0: i32) -> (i32, i32) {
    %c0_i32 = arith.constant 0 : i32
    %c0_i32_0 = arith.constant 0 : i32
    return %arg0, %c0_i32 : i32, i32
  }
}

</mosaic_0001>

<llo_original>
// kernel: tpu_custom_call.1
$region0: #{tpu_custom_call.1}
  #allocation0 [shape = 'u32[]', space=smem, size = 0x4, offset = 0x4, fixed_abs, tag = 'smem constant byte address 0x4 - core index']
  #allocation1 [shape = 'u32[144,128]{1,0:T(1,128)}', space=vmem, size = 0x12000, scoped, tag = 'internal scratch']
  %s0 = inlined_call_operand.hbm [shape: f32[32,128], index: 0, kind: input, shape index: {}]
  %s1 = inlined_call_operand.hbm [shape: f32[32,128], index: 1, kind: input, shape index: {}]
  %s2 = inlined_call_operand.hbm [shape: bf16[128,128], index: 2, kind: input, shape index: {}]
  %s3 = inlined_call_operand.hbm [shape: bf16[128,128], index: 3, kind: input, shape index: {}]
  %s4 = inlined_call_operand.vmem [shape: f32[1,128], index: 4, kind: input, shape index: {}]
  %s5 = inlined_call_operand.vmem [shape: f32[1,128], index: 5, kind: input, shape index: {}]
  %s6 = inlined_call_operand.hbm [shape: f32[32,128], index: 6, kind: output, shape index: {0}]
  %s7 = inlined_call_operand.vmem [shape: f32[32,2], index: 7, kind: output, shape index: {1}]
  %8 = xla_tuple %s6, %s7
  %s9 = sld [smem:[#allocation0]]
  $region81: #{tpu_custom_call.1} parent=0
    _
  %s11 = ssub.s32 1, %s9
  %s12 = scalar_select 0, %s11, %s9
  $region1: #{tpu_custom_call.1} parent=0
    #allocation2 [shape = 'u8[16384]{0}', space=vmem, size = 0x4000, scoped, tag = 'input window, operand 0']
    #allocation3 [shape = 's32[2]{0}', space=sflag, size = 0x8, scoped, tag = 'scoped memory for tpu_custom_call.1']
    #allocation4 [shape = 's32[2]{0}', space=sflag, size = 0x8, scoped, tag = 'scoped memory for tpu_custom_call.1']
    #allocation5 [shape = 'u8[16384]{0}', space=vmem, size = 0x4000, scoped, tag = 'input window, operand 1']
    #allocation6 [shape = 's32[2]{0}', space=sflag, size = 0x8, scoped, tag = 'scoped memory for tpu_custom_call.1']
    #allocation7 [shape = 'u8[32768]{0}', space=vmem, size = 0x8000, scoped, tag = 'input window, operand 2, single buffered']
    #allocation8 [shape = 'u8[32768]{0}', space=vmem, size = 0x8000, scoped, tag = 'input window, operand 3, single buffered']
    #allocation9 [shape = 's32[1]{0}', space=sflag, size = 0x4, scoped, tag = 'scoped memory for tpu_custom_call.1']
    #allocation10 [shape = 'u8[16384]{0}', space=vmem, size = 0x4000, scoped, tag = 'output window, operand 0']
    %13 = vsyncpa [#allocation3], 0
    %s14 = scalar_lea.sflag [#allocation3], 1
    %15 = vsyncpa %s14, 0
    %16 = vsyncpa [#allocation6], 0
    %s17 = scalar_lea.sflag [#allocation6], 1
    %18 = vsyncpa %s17, 0
    %19 = vsyncpa [#allocation9], 0
    %20 = vsyncpa [#allocation4], 0
    %s21 = scalar_lea.sflag [#allocation4], 1
    %22 = vsyncpa %s21, 0
    loop: start=0, step=1, limit=4
    $region2: #{tpu_custom_call.1} parent=1 // loop_pre_header
      _
    $region3: #{tpu_custom_call.1} parent=1 // loop_header
      %s24 = sphi 0, %s28
      %p25 = scmp.ge.s32.totalorder %s24, 4
      %s34 = sphi 0, %s36
      %s37 = sphi 0, %s34
      %s38 = sphi 0, %s37
      %s54 = sphi 0, %s38
      %s60 = sphi 0, %s62
      %s63 = sphi 0, %s60
      %s64 = sphi 0, %s63
      %s80 = sphi 0, %s64
      %s84 = sphi 0, %s84
      %s86 = sphi 0, %s84
      %s87 = sphi 0, %s86
      %s101 = sphi 0, %s87
      %s105 = sphi 0, %s105
      %s107 = sphi 0, %s105
      %s108 = sphi 0, %s107
      %s122 = sphi 0, %s108
      %s126 = sphi 0, %s126
      %s128 = sphi 0, %s126
      %s129 = sphi 0, %s128
      %s143 = sphi 0, %s129
      %s147 = sphi 0, %s147
      %s149 = sphi 0, %s147
      %s150 = sphi 0, %s149
      %s164 = sphi 0, %s150
      %s170 = sphi 0, %s172
      %s173 = sphi 0, %s170
      %s174 = sphi 0, %s173
      %s190 = sphi 0, %s174
      %s196 = sphi 0, %s198
      %s199 = sphi 0, %s196
      %s200 = sphi 0, %s199
      %s216 = sphi 0, %s200
    $region4: #{tpu_custom_call.1} parent=1 // loop_header_branch
      %27 = sbr.rel (%p25) target = $region8
    $region5: #{tpu_custom_call.1} parent=1 // loop_body
      %s29 = ssub.s32 %s24, 1
      %s30 = ssub.s32 %s24, 2
      %s31 = sadd.s32 %s24, 1
      %s32 = ssub.s32 %s24, %s31
      %p33 = scmp.eq.s32.totalorder %s32, 0
      %s35 = sadd.s32 %s34, 1
      %s36 = scalar_select %p33, %s34, %s35
      %p39 = pneg %p33
      %p40 = scmp.eq.s32.totalorder %s24, 1
      %p41 = por %p39, %p40
      %p42 = scmp.ne.s32.totalorder %s34, %s37
      %p43 = scmp.eq.s32.totalorder %s24, 0
      %p44 = por %p42, %p43
      %p45 = scmp.ne.s32.totalorder %s34, %s37
      %p46 = scmp.eq.s32.totalorder %s29, 1
      %p47 = por %p45, %p46
      %p48 = scmp.ne.s32.totalorder %s37, %s38
      %p49 = scmp.eq.s32.totalorder %s29, 0
      %p50 = por %p48, %p49
      %p51 = scmp.ne.s32.totalorder %s37, %s38
      %p52 = scmp.eq.s32.totalorder %s30, 1
      %p53 = por %p51, %p52
      %p55 = scmp.ne.s32.totalorder %s38, %s54
      %p56 = scmp.eq.s32.totalorder %s30, 0
      %p57 = por %p55, %p56
      %s58 = ssub.s32 %s24, %s31
      %p59 = scmp.eq.s32.totalorder %s58, 0
      %s61 = sadd.s32 %s60, 1
      %s62 = scalar_select %p59, %s60, %s61
      %p65 = pneg %p59
      %p66 = scmp.eq.s32.totalorder %s24, 1
      %p67 = por %p65, %p66
      %p68 = scmp.ne.s32.totalorder %s60, %s63
      %p69 = scmp.eq.s32.totalorder %s24, 0
      %p70 = por %p68, %p69
      %p71 = scmp.ne.s32.totalorder %s60, %s63
      %p72 = scmp.eq.s32.totalorder %s29, 1
      %p73 = por %p71, %p72
      %p74 = scmp.ne.s32.totalorder %s63, %s64
      %p75 = scmp.eq.s32.totalorder %s29, 0
      %p76 = por %p74, %p75
      %p77 = scmp.ne.s32.totalorder %s63, %s64
      %p78 = scmp.eq.s32.totalorder %s30, 1
      %p79 = por %p77, %p78
      %p81 = scmp.ne.s32.totalorder %s64, %s80
      %p82 = scmp.eq.s32.totalorder %s30, 0
      %p83 = por %p81, %p82
      %s85 = sadd.s32 %s84, 1
      %p88 = scmp.eq.s32.totalorder %s24, 1
      %p89 = scmp.ne.s32.totalorder %s84, %s86
      %p90 = scmp.eq.s32.totalorder %s24, 0
      %p91 = por %p89, %p90
      %p92 = scmp.ne.s32.totalorder %s84, %s86
      %p93 = scmp.eq.s32.totalorder %s29, 1
      %p94 = por %p92, %p93
      %p95 = scmp.ne.s32.totalorder %s86, %s87
      %p96 = scmp.eq.s32.totalorder %s29, 0
      %p97 = por %p95, %p96
      %p98 = scmp.ne.s32.totalorder %s86, %s87
      %p99 = scmp.eq.s32.totalorder %s30, 1
      %p100 = por %p98, %p99
      %p102 = scmp.ne.s32.totalorder %s87, %s101
      %p103 = scmp.eq.s32.totalorder %s30, 0
      %p104 = por %p102, %p103
      %s106 = sadd.s32 %s105, 1
      %p109 = scmp.eq.s32.totalorder %s24, 1
      %p110 = scmp.ne.s32.totalorder %s105, %s107
      %p111 = scmp.eq.s32.totalorder %s24, 0
      %p112 = por %p110, %p111
      %p113 = scmp.ne.s32.totalorder %s105, %s107
      %p114 = scmp.eq.s32.totalorder %s29, 1
      %p115 = por %p113, %p114
      %p116 = scmp.ne.s32.totalorder %s107, %s108
      %p117 = scmp.eq.s32.totalorder %s29, 0
      %p118 = por %p116, %p117
      %p119 = scmp.ne.s32.totalorder %s107, %s108
      %p120 = scmp.eq.s32.totalorder %s30, 1
      %p121 = por %p119, %p120
      %p123 = scmp.ne.s32.totalorder %s108, %s122
      %p124 = scmp.eq.s32.totalorder %s30, 0
      %p125 = por %p123, %p124
      %s127 = sadd.s32 %s126, 1
      %p130 = scmp.eq.s32.totalorder %s24, 1
      %p131 = scmp.ne.s32.totalorder %s126, %s128
      %p132 = scmp.eq.s32.totalorder %s24, 0
      %p133 = por %p131, %p132
      %p134 = scmp.ne.s32.totalorder %s126, %s128
      %p135 = scmp.eq.s32.totalorder %s29, 1
      %p136 = por %p134, %p135
      %p137 = scmp.ne.s32.totalorder %s128, %s129
      %p138 = scmp.eq.s32.totalorder %s29, 0
      %p139 = por %p137, %p138
      %p140 = scmp.ne.s32.totalorder %s128, %s129
      %p141 = scmp.eq.s32.totalorder %s30, 1
      %p142 = por %p140, %p141
      %p144 = scmp.ne.s32.totalorder %s129, %s143
      %p145 = scmp.eq.s32.totalorder %s30, 0
      %p146 = por %p144, %p145
      %s148 = sadd.s32 %s147, 1
      %p151 = scmp.eq.s32.totalorder %s24, 1
      %p152 = scmp.ne.s32.totalorder %s147, %s149
      %p153 = scmp.eq.s32.totalorder %s24, 0
      %p154 = por %p152, %p153
      %p155 = scmp.ne.s32.totalorder %s147, %s149
      %p156 = scmp.eq.s32.totalorder %s29, 1
      %p157 = por %p155, %p156
      %p158 = scmp.ne.s32.totalorder %s149, %s150
      %p159 = scmp.eq.s32.totalorder %s29, 0
      %p160 = por %p158, %p159
      %p161 = scmp.ne.s32.totalorder %s149, %s150
      %p162 = scmp.eq.s32.totalorder %s30, 1
      %p163 = por %p161, %p162
      %p165 = scmp.ne.s32.totalorder %s150, %s164
      %p166 = scmp.eq.s32.totalorder %s30, 0
      %p167 = por %p165, %p166
      %s168 = ssub.s32 %s24, %s31
      %p169 = scmp.eq.s32.totalorder %s168, 0
      %s171 = sadd.s32 %s170, 1
      %s172 = scalar_select %p169, %s170, %s171
      %p175 = pneg %p169
      %p176 = scmp.eq.s32.totalorder %s24, 1
      %p177 = por %p175, %p176
      %p178 = scmp.ne.s32.totalorder %s170, %s173
      %p179 = scmp.eq.s32.totalorder %s24, 0
      %p180 = por %p178, %p179
      %p181 = scmp.ne.s32.totalorder %s170, %s173
      %p182 = scmp.eq.s32.totalorder %s29, 1
      %p183 = por %p181, %p182
      %p184 = scmp.ne.s32.totalorder %s173, %s174
      %p185 = scmp.eq.s32.totalorder %s29, 0
      %p186 = por %p184, %p185
      %p187 = scmp.ne.s32.totalorder %s173, %s174
      %p188 = scmp.eq.s32.totalorder %s30, 1
      %p189 = por %p187, %p188
      %p191 = scmp.ne.s32.totalorder %s174, %s190
      %p192 = scmp.eq.s32.totalorder %s30, 0
      %p193 = por %p191, %p192
      %s194 = ssub.s32 %s24, %s31
      %p195 = scmp.eq.s32.totalorder %s194, 0
      %s197 = sadd.s32 %s196, 1
      %s198 = scalar_select %p195, %s196, %s197
      %p201 = pneg %p195
      %p202 = scmp.eq.s32.totalorder %s24, 1
      %p203 = por %p201, %p202
      %p204 = scmp.ne.s32.totalorder %s196, %s199
      %p205 = scmp.eq.s32.totalorder %s24, 0
      %p206 = por %p204, %p205
      %p207 = scmp.ne.s32.totalorder %s196, %s199
      %p208 = scmp.eq.s32.totalorder %s29, 1
      %p209 = por %p207, %p208
      %p210 = scmp.ne.s32.totalorder %s199, %s200
      %p211 = scmp.eq.s32.totalorder %s29, 0
      %p212 = por %p210, %p211
      %p213 = scmp.ne.s32.totalorder %s199, %s200
      %p214 = scmp.eq.s32.totalorder %s30, 1
      %p215 = por %p213, %p214
      %p217 = scmp.ne.s32.totalorder %s200, %s216
      %p218 = scmp.eq.s32.totalorder %s30, 0
      %p219 = por %p217, %p218
      %p220 = scmp.le.s32.totalorder 1, %s24
      %p221 = scmp.lt.s32.totalorder %s24, 3
      %p222 = pnand %p220, %p221
      %p223 = pneg %p222
      // Predicated region
      $region9: #{tpu_custom_call.1} parent=5 // pred_check
        _
      $region10: #{tpu_custom_call.1} parent=5 // pred_check_branch
        %225 = sbr.rel (%p222) target = $region12
      $region11: #{tpu_custom_call.1} parent=5 // pred_region
        %s226 = ssub.s32 %s24, 1
        // Predicated region
        $region13: #{tpu_custom_call.1} parent=11 // pred_check
          %p227 = pneg %p97
        $region14: #{tpu_custom_call.1} parent=11 // pred_check_branch
          %229 = sbr.rel (%p227) target = $region16
        $region15: #{tpu_custom_call.1} parent=11 // pred_region
          %s231 = ssub.s32 1024, 1024
          %232 = vsyncadd [#allocation6], %s231
          %s233 = sshll.u32 [#allocation7], 4
          %s234 = int_to_ptr.vmem [resolvable:$true] %s233
          %239 = dma.hbm_to_vmem [thread:$0]  %s2, 1024, %s234, [#allocation6], 64, 64, 4
        $region16: #{tpu_custom_call.1} parent=11 // pred_fallthru
          _
        // Predicated region
        $region17: #{tpu_custom_call.1} parent=11 // pred_check
          %p240 = pneg %p118
        $region18: #{tpu_custom_call.1} parent=11 // pred_check_branch
          %242 = sbr.rel (%p240) target = $region20
        $region19: #{tpu_custom_call.1} parent=11 // pred_region
          %s244 = ssub.s32 1024, 1024
          %245 = vsyncadd [#allocation9], %s244
          %s246 = sshll.u32 [#allocation8], 4
          %s247 = int_to_ptr.vmem [resolvable:$true] %s246
          %252 = dma.hbm_to_vmem [thread:$0]  %s3, 1024, %s247, [#allocation9], 64, 64, 4
        $region20: #{tpu_custom_call.1} parent=11 // pred_fallthru
          _
        // Predicated region
        $region21: #{tpu_custom_call.1} parent=11 // pred_check
          %p253 = pneg %p139
        $region22: #{tpu_custom_call.1} parent=11 // pred_check_branch
          %255 = sbr.rel (%p253) target = $region24
        $region23: #{tpu_custom_call.1} parent=11 // pred_region
          _
        $region24: #{tpu_custom_call.1} parent=11 // pred_fallthru
          _
        // Predicated region
        $region25: #{tpu_custom_call.1} parent=11 // pred_check
          %p256 = pneg %p160
        $region26: #{tpu_custom_call.1} parent=11 // pred_check_branch
          %258 = sbr.rel (%p256) target = $region28
        $region27: #{tpu_custom_call.1} parent=11 // pred_region
          _
        $region28: #{tpu_custom_call.1} parent=11 // pred_fallthru
          _
      $region12: #{tpu_custom_call.1} parent=5 // pred_fallthru
        _
      %p259 = scmp.lt.s32.totalorder %s24, 2
      // Predicated region
      $region29: #{tpu_custom_call.1} parent=5 // pred_check
        %p260 = pneg %p259
      $region30: #{tpu_custom_call.1} parent=5 // pred_check_branch
        %262 = sbr.rel (%p260) target = $region32
      $region31: #{tpu_custom_call.1} parent=5 // pred_region
        // Predicated region
        $region33: #{tpu_custom_call.1} parent=31 // pred_check
          %p263 = pneg %p44
        $region34: #{tpu_custom_call.1} parent=31 // pred_check_branch
          %265 = sbr.rel (%p263) target = $region36
        $region35: #{tpu_custom_call.1} parent=31 // pred_region
          %s266 = sand.u32 %s34, 1
          %s267 = scalar_lea.sflag [#allocation3], %s266
          %s268 = sand.u32 %s34, 1
          %s269 = smul.addr %s268, 16
          %s270 = scalar_lea.vmem [#allocation2], %s269
          %s271 = smul.u32 2, %s24
          %s273 = ssub.s32 256, 256
          %274 = vsyncadd %s267, %s273
          %s275 = smul.addr %s271, 128
          %s276 = scalar_lea.hbm %s0, %s275
          %s277 = sshll.u32 %s270, 4
          %s278 = int_to_ptr.vmem [resolvable:$true] %s277
          %283 = dma.hbm_to_vmem [thread:$0]  %s276, 256, %s278, %s267, 128, 128, 8
        $region36: #{tpu_custom_call.1} parent=31 // pred_fallthru
          _
        // Predicated region
        $region37: #{tpu_custom_call.1} parent=31 // pred_check
          %p284 = pneg %p70
        $region38: #{tpu_custom_call.1} parent=31 // pred_check_branch
          %286 = sbr.rel (%p284) target = $region40
        $region39: #{tpu_custom_call.1} parent=31 // pred_region
          %s287 = sand.u32 %s24, 1
          %s288 = scalar_lea.sflag [#allocation6], %s287
          %s289 = sand.u32 %s60, 1
          %s290 = smul.addr %s289, 16
          %s291 = scalar_lea.vmem [#allocation5], %s290
          %s292 = smul.u32 2, %s24
          %s294 = ssub.s32 256, 256
          %295 = vsyncadd %s288, %s294
          %s296 = smul.addr %s292, 128
          %s297 = scalar_lea.hbm %s1, %s296
          %s298 = sshll.u32 %s291, 4
          %s299 = int_to_ptr.vmem [resolvable:$true] %s298
          %304 = dma.hbm_to_vmem [thread:$0]  %s297, 256, %s299, %s288, 128, 128, 8
        $region40: #{tpu_custom_call.1} parent=31 // pred_fallthru
          _
      $region32: #{tpu_custom_call.1} parent=5 // pred_fallthru
        _
      %p305 = scmp.le.s32.totalorder 1, %s24
      %p306 = scmp.lt.s32.totalorder %s24, 3
      %p307 = pnand %p305, %p306
      %p308 = pneg %p307
      // Predicated region
      $region41: #{tpu_custom_call.1} parent=5 // pred_check
        _
      $region42: #{tpu_custom_call.1} parent=5 // pred_check_branch
        %310 = sbr.rel (%p307) target = $region44
      $region43: #{tpu_custom_call.1} parent=5 // pred_region
        %s311 = ssub.s32 %s24, 1
        %s312 = sand.u32 %s37, 1
        %s313 = scalar_lea.sflag [#allocation3], %s312
        %s314 = sand.u32 %s37, 1
        %s315 = smul.addr %s314, 16
        %s316 = scalar_lea.vmem [#allocation2], %s315
        // Predicated region
        $region45: #{tpu_custom_call.1} parent=43 // pred_check
          %p317 = pneg %p50
        $region46: #{tpu_custom_call.1} parent=43 // pred_check_branch
          %319 = sbr.rel (%p317) target = $region48
        $region47: #{tpu_custom_call.1} parent=43 // pred_region
          %320 = dma.done %s313, 256
        $region48: #{tpu_custom_call.1} parent=43 // pred_fallthru
          _
        %s321 = sand.u32 %s29, 1
        %s322 = scalar_lea.sflag [#allocation6], %s321
        %s323 = sand.u32 %s63, 1
        %s324 = smul.addr %s323, 16
        %s325 = scalar_lea.vmem [#allocation5], %s324
        // Predicated region
        $region49: #{tpu_custom_call.1} parent=43 // pred_check
          %p326 = pneg %p76
        $region50: #{tpu_custom_call.1} parent=43 // pred_check_branch
          %328 = sbr.rel (%p326) target = $region52
        $region51: #{tpu_custom_call.1} parent=43 // pred_region
          %329 = dma.done %s322, 256
        $region52: #{tpu_custom_call.1} parent=43 // pred_fallthru
          _
        // Predicated region
        $region53: #{tpu_custom_call.1} parent=43 // pred_check
          %p330 = pneg %p97
        $region54: #{tpu_custom_call.1} parent=43 // pred_check_branch
          %332 = sbr.rel (%p330) target = $region56
        $region55: #{tpu_custom_call.1} parent=43 // pred_region
          %333 = dma.done [#allocation6], 1024
        $region56: #{tpu_custom_call.1} parent=43 // pred_fallthru
          _
        // Predicated region
        $region57: #{tpu_custom_call.1} parent=43 // pred_check
          %p334 = pneg %p118
        $region58: #{tpu_custom_call.1} parent=43 // pred_check_branch
          %336 = sbr.rel (%p334) target = $region60
        $region59: #{tpu_custom_call.1} parent=43 // pred_region
          %337 = dma.done [#allocation9], 1024
        $region60: #{tpu_custom_call.1} parent=43 // pred_fallthru
          _
        %s338 = sand.u32 %s37, 1
        %s339 = scalar_lea.sflag [#allocation3], %s338
        %s340 = sand.u32 %s37, 1
        %s341 = smul.addr %s340, 16
        %s342 = scalar_lea.vmem [#allocation2], %s341
        %p343 = pneg %p50
        %p344 = pneg %p47
        %s345 = sand.u32 %s29, 1
        %s346 = scalar_lea.sflag [#allocation6], %s345
        %s347 = sand.u32 %s63, 1
        %s348 = smul.addr %s347, 16
        %s349 = scalar_lea.vmem [#allocation5], %s348
        %p350 = pneg %p76
        %p351 = pneg %p73
        %p352 = pneg %p97
        %p353 = pneg %p94
        %p354 = pneg %p118
        %p355 = pneg %p115
        %p356 = pneg %p139
        %p357 = pneg %p136
        %p358 = pneg %p160
        %p359 = pneg %p157
        %p360 = pneg %p186
        %p361 = pneg %p183
        %s362 = sand.u32 %s173, 1
        %s363 = scalar_lea.sflag [#allocation4], %s362
        %s364 = sand.u32 %s173, 1
        %s365 = smul.addr %s364, 16
        %s366 = scalar_lea.vmem [#allocation10], %s365
        %p367 = pneg %p212
        %p368 = pneg %p209
        %s369 = smul.u32 2, %s29
        %p370 = scmp.lt.s32.totalorder %s369, 3
        %s371 = scalar_select %p370, %s369, 3
        %s372 = smul.addr %s371, 8
        %s373 = scalar_lea.vmem %s7, %s372
        %s374 = smul.u32 2, %s29
        %s375 = smul.u32 2, %s29
        %s376 = smul.u32 2, %s29
        %s377 = smul.u32 2, %s29
        %p378 = scmp.lt.s32.totalorder %s377, 3
        %s379 = scalar_select %p378, %s377, 3
        %s380 = smul.addr %s379, 8
        %s381 = scalar_lea.vmem %s7, %s380
        %s382 = smul.u32 2, %s29
        %v384 = vld [vmem:[%s316] sm:$0xff]
        %v385 = vld [vmem:[%s316 + $0x8] sm:$0xff]
        %v386 = vld [vmem:[%s325] sm:$0xff]
        %v387 = vld [vmem:[%s325 + $0x8] sm:$0xff]
        %v388 = vpack.c.bf16 %v385, %v384
        %v389 = vld [vmem:[#allocation7] sm:$0xf]
        %v390 = vld [vmem:[#allocation7 + $0x4] sm:$0xf]
        %v391 = vld [vmem:[#allocation7 + $0x8] sm:$0xf]
        %v392 = vld [vmem:[#allocation7 + $0xc] sm:$0xf]
        %v393 = vld [vmem:[#allocation7 + $0x10] sm:$0xf]
        %v394 = vld [vmem:[#allocation7 + $0x14] sm:$0xf]
        %v395 = vld [vmem:[#allocation7 + $0x18] sm:$0xf]
        %v396 = vld [vmem:[#allocation7 + $0x1c] sm:$0xf]
        %v397 = vld [vmem:[#allocation7 + $0x20] sm:$0xf]
        %v398 = vld [vmem:[#allocation7 + $0x24] sm:$0xf]
        %v399 = vld [vmem:[#allocation7 + $0x28] sm:$0xf]
        %v400 = vld [vmem:[#allocation7 + $0x2c] sm:$0xf]
        %v401 = vld [vmem:[#allocation7 + $0x30] sm:$0xf]
        %v402 = vld [vmem:[#allocation7 + $0x34] sm:$0xf]
        %v403 = vld [vmem:[#allocation7 + $0x38] sm:$0xf]
        %v404 = vld [vmem:[#allocation7 + $0x3c] sm:$0xf]
        %v405 = vpack.c.bf16 %v387, %v386
        %v406 = vld [vmem:[#allocation8] sm:$0xf]
        %v407 = vld [vmem:[#allocation8 + $0x4] sm:$0xf]
        %v408 = vld [vmem:[#allocation8 + $0x8] sm:$0xf]
        %v409 = vld [vmem:[#allocation8 + $0xc] sm:$0xf]
        %v410 = vld [vmem:[#allocation8 + $0x10] sm:$0xf]
        %v411 = vld [vmem:[#allocation8 + $0x14] sm:$0xf]
        %v412 = vld [vmem:[#allocation8 + $0x18] sm:$0xf]
        %v413 = vld [vmem:[#allocation8 + $0x1c] sm:$0xf]
        %v414 = vld [vmem:[#allocation8 + $0x20] sm:$0xf]
        %v415 = vld [vmem:[#allocation8 + $0x24] sm:$0xf]
        %v416 = vld [vmem:[#allocation8 + $0x28] sm:$0xf]
        %v417 = vld [vmem:[#allocation8 + $0x2c] sm:$0xf]
        %v418 = vld [vmem:[#allocation8 + $0x30] sm:$0xf]
        %v419 = vld [vmem:[#allocation8 + $0x34] sm:$0xf]
        %v420 = vld [vmem:[#allocation8 + $0x38] sm:$0xf]
        %v421 = vld [vmem:[#allocation8 + $0x3c] sm:$0xf]
        %v438 = vunpack.c.l.b16 %v406
        %v439 = vunpack.c.l.b16 %v407
        %v440 = vunpack.c.l.b16 %v408
        %v441 = vunpack.c.l.b16 %v409
        %v442 = vunpack.c.l.b16 %v410
        %v443 = vunpack.c.l.b16 %v411
        %v444 = vunpack.c.l.b16 %v412
        %v445 = vunpack.c.l.b16 %v413
        %v446 = vunpack.c.l.b16 %v414
        %v447 = vunpack.c.l.b16 %v415
        %v448 = vunpack.c.l.b16 %v416
        %v449 = vunpack.c.l.b16 %v417
        %v450 = vunpack.c.l.b16 %v418
        %v451 = vunpack.c.l.b16 %v419
        %v452 = vunpack.c.l.b16 %v420
        %v453 = vunpack.c.l.b16 %v421
        %v454 = vpack.c.b16 %v439, %v438
        %v455 = vpack.c.b16 %v441, %v440
        %v456 = vpack.c.b16 %v443, %v442
        %v457 = vpack.c.b16 %v445, %v444
        %v458 = vpack.c.b16 %v447, %v446
        %v459 = vpack.c.b16 %v449, %v448
        %v460 = vpack.c.b16 %v451, %v450
        %v461 = vpack.c.b16 %v453, %v452
        %470 = vmatprep.subr.bf16.mxu0 0
        %471 = vmatpush1.bf16.msra.mxu0 %v461
        %472 = vmatprep.subr.bf16.mxu0 0
        %473 = vmatpush1.bf16.msra.mxu0 %v460
        %474 = vmatprep.subr.bf16.mxu0 0
        %475 = vmatpush1.bf16.msra.mxu0 %v459
        %476 = vmatprep.subr.bf16.mxu0 0
        %477 = vmatpush1.bf16.msra.mxu0 %v458
        %478 = vmatprep.subr.bf16.mxu0 0
        %479 = vmatpush1.bf16.msra.mxu0 %v457
        %480 = vmatprep.subr.bf16.mxu0 0
        %481 = vmatpush1.bf16.msra.mxu0 %v456
        %482 = vmatprep.subr.bf16.mxu0 0
        %483 = vmatpush1.bf16.msra.mxu0 %v455
        %484 = vmatprep.subr.bf16.mxu0 0
        %485 = vmatpush1.bf16.msra.mxu0 %v454
        %486 = vmatprep.subr.bf16.mxu0 0
        %487 = vmatpush2.bf16.msra.mxu0 0
        %488 = vmatprep.subr.bf16.mxu0 0
        %489 = vmatpush2.bf16.msra.mxu0 0
        %490 = vmatprep.subr.bf16.mxu0 0
        %491 = vmatpush2.bf16.msra.mxu0 0
        %492 = vmatprep.subr.bf16.mxu0 0
        %493 = vmatpush2.bf16.msra.mxu0 0
        %494 = vmatprep.subr.bf16.mxu0 0
        %495 = vmatpush2.bf16.msra.mxu0 0
        %496 = vmatprep.subr.bf16.mxu0 0
        %497 = vmatpush2.bf16.msra.mxu0 0
        %498 = vmatprep.subr.bf16.mxu0 0
        %499 = vmatpush2.bf16.msra.mxu0 0
        %500 = vmatprep.subr.bf16.mxu0 0
        %501 = vmatpush2.bf16.msra.mxu0 0
        %502 = vmatprep.mubr.bf16.mxu0 0
        %503 = vmatmul.mubr.bf16.gmra.mxu0 %v405
        %v504 = vpop.f32.mrf.mxu0
        %v505 = vadd.f32 0.0, %v504
        %v506 = vpop.f32.mrf.mxu0
        %v507 = vpop.f32.mrf.mxu0
        %v508 = vadd.f32 0.0, %v507
        %v509 = vpop.f32.mrf.mxu0
        %510 = vdwg.mxu0
        %v527 = vunpack.c.l.b16 %v389
        %v528 = vunpack.c.l.b16 %v390
        %v529 = vunpack.c.l.b16 %v391
        %v530 = vunpack.c.l.b16 %v392
        %v531 = vunpack.c.l.b16 %v393
        %v532 = vunpack.c.l.b16 %v394
        %v533 = vunpack.c.l.b16 %v395
        %v534 = vunpack.c.l.b16 %v396
        %v535 = vunpack.c.l.b16 %v397
        %v536 = vunpack.c.l.b16 %v398
        %v537 = vunpack.c.l.b16 %v399
        %v538 = vunpack.c.l.b16 %v400
        %v539 = vunpack.c.l.b16 %v401
        %v540 = vunpack.c.l.b16 %v402
        %v541 = vunpack.c.l.b16 %v403
        %v542 = vunpack.c.l.b16 %v404
        %v543 = vpack.c.b16 %v528, %v527
        %v544 = vpack.c.b16 %v530, %v529
        %v545 = vpack.c.b16 %v532, %v531
        %v546 = vpack.c.b16 %v534, %v533
        %v547 = vpack.c.b16 %v536, %v535
        %v548 = vpack.c.b16 %v538, %v537
        %v549 = vpack.c.b16 %v540, %v539
        %v550 = vpack.c.b16 %v542, %v541
        %559 = vmatprep.subr.bf16.mxu0 0
        %560 = vmatpush1.bf16.msra.mxu0 %v550
        %561 = vmatprep.subr.bf16.mxu0 0
        %562 = vmatpush1.bf16.msra.mxu0 %v549
        %563 = vmatprep.subr.bf16.mxu0 0
        %564 = vmatpush1.bf16.msra.mxu0 %v548
        %565 = vmatprep.subr.bf16.mxu0 0
        %566 = vmatpush1.bf16.msra.mxu0 %v547
        %567 = vmatprep.subr.bf16.mxu0 0
        %568 = vmatpush1.bf16.msra.mxu0 %v546
        %569 = vmatprep.subr.bf16.mxu0 0
        %570 = vmatpush1.bf16.msra.mxu0 %v545
        %571 = vmatprep.subr.bf16.mxu0 0
        %572 = vmatpush1.bf16.msra.mxu0 %v544
        %573 = vmatprep.subr.bf16.mxu0 0
        %574 = vmatpush1.bf16.msra.mxu0 %v543
        %575 = vmatprep.subr.bf16.mxu0 0
        %576 = vmatpush2.bf16.msra.mxu0 0
        %577 = vmatprep.subr.bf16.mxu0 0
        %578 = vmatpush2.bf16.msra.mxu0 0
        %579 = vmatprep.subr.bf16.mxu0 0
        %580 = vmatpush2.bf16.msra.mxu0 0
        %581 = vmatprep.subr.bf16.mxu0 0
        %582 = vmatpush2.bf16.msra.mxu0 0
        %583 = vmatprep.subr.bf16.mxu0 0
        %584 = vmatpush2.bf16.msra.mxu0 0
        %585 = vmatprep.subr.bf16.mxu0 0
        %586 = vmatpush2.bf16.msra.mxu0 0
        %587 = vmatprep.subr.bf16.mxu0 0
        %588 = vmatpush2.bf16.msra.mxu0 0
        %589 = vmatprep.subr.bf16.mxu0 0
        %590 = vmatpush2.bf16.msra.mxu0 0
        %591 = vmatprep.mubr.bf16.mxu0 0
        %592 = vmatmul.mubr.bf16.gmra.mxu0 %v388
        %v593 = vpop.f32.mrf.mxu0
        %v594 = vadd.f32 %v505, %v593
        %v595 = vpop.f32.mrf.mxu0
        %v596 = vpop.f32.mrf.mxu0
        %v597 = vadd.f32 %v508, %v596
        %v598 = vpop.f32.mrf.mxu0
        %599 = vdwg.mxu0
        %v600 = vld [vmem:[%s4] sm:$0x1]
        %v602 = vlaneseq
        %v603 = vshrl.u32 %v602, 7
        %v604 = vsub.s32 0, %v603
        %v605 = vrot.slane %v600, %v604
        %v607 = vadd.f32 %v594, %v605
        %v608 = vadd.f32 %v597, %v605
        %v609 = vmax.f32 %v607, 0.0
        %v610 = vmax.f32 %v608, 0.0
        %v611 = vld [vmem:[%s5] sm:$0x1]
        %v613 = vlaneseq
        %v614 = vshrl.u32 %v613, 7
        %v615 = vsub.s32 0, %v614
        %v616 = vrot.slane %v611, %v615
        %v618 = vmul.f32 %v609, %v616
        %v619 = vmul.f32 %v610, %v616
        %620 = vadd.xlane.f32.xlu0 %v618
        %v621 = vpop.xlane.xlu0 %620
        %622 = vadd.xlane.f32.xlu0 %v619
        %v623 = vpop.xlane.xlu0 %622
        %vm624 = vcmp.gt.f32.partialorder %v621, 0.062442068
        %vm625 = vcmp.gt.f32.partialorder %v623, 0.062442068
        %vm626 = vcmp.lt.f32.partialorder %v621, 0.062442068
        %vm627 = vcmp.lt.f32.partialorder %v623, 0.062442068
        %v628 = vlaneseq
        %v629 = vand.u32 %v628, 127
        %vm630 = vcmp.eq.s32.totalorder %v629, 0
        %v631 = vsel %vm624, 1, 0
        %v632 = vsel %vm625, 1, 0
        %v633 = vcvt.s32.f32 %v631
        %v634 = vcvt.s32.f32 %v632
        %v635 = vsel %vm626, 1, 0
        %v636 = vsel %vm627, 1, 0
        %v637 = vcvt.s32.f32 %v635
        %v638 = vcvt.s32.f32 %v636
        %v639 = vsel %vm630, %v633, %v637
        %v640 = vsel %vm630, %v634, %v638
        %vm641 = vcmask 15360
        %642 = vst.msk [vmem:[%s381] sm:$0xff] %vm641, %v639
        %643 = vst.msk [vmem:[%s381 + $0x8] sm:$0xff] %vm641, %v640
        %vm644 = vcmp.eq.s32.totalorder %v635, 1
        %vm645 = vcmp.eq.s32.totalorder %v636, 1
        %v646 = vsel %vm644, %v386, 0.0
        %v647 = vsel %vm645, %v387, 0.0
        %vm648 = vcmp.eq.s32.totalorder %v631, 1
        %vm649 = vcmp.eq.s32.totalorder %v632, 1
        %v650 = vsel %vm648, %v384, %v646
        %v651 = vsel %vm649, %v385, %v647
        %652 = vst [vmem:[%s366] sm:$0xff] %v650
        %653 = vst [vmem:[%s366 + $0x8] sm:$0xff] %v651
        %s654 = sand.u32 %s173, 1
        %s655 = scalar_lea.sflag [#allocation4], %s654
        %s656 = sand.u32 %s173, 1
        %s657 = smul.addr %s656, 16
        %s658 = scalar_lea.vmem [#allocation10], %s657
        %s659 = smul.u32 2, %s29
        %p660 = scmp.lt.s32.totalorder %s659, 3
        %s661 = scalar_select %p660, %s659, 3
        %s662 = smul.addr %s661, 8
        %s663 = scalar_lea.vmem %s7, %s662
        // Predicated region
        $region61: #{tpu_custom_call.1} parent=43 // pred_check
          %p664 = pneg %p183
        $region62: #{tpu_custom_call.1} parent=43 // pred_check_branch
          %666 = sbr.rel (%p664) target = $region64
        $region63: #{tpu_custom_call.1} parent=43 // pred_region
          %s667 = smul.u32 2, %s29
          %s669 = ssub.s32 256, 256
          %670 = vsyncadd %s655, %s669
          %s671 = smul.addr %s667, 128
          %s672 = scalar_lea.hbm %s6, %s671
          %s673 = sshll.u32 %s658, 4
          %s674 = int_to_ptr.vmem [resolvable:$true] %s673
          %679 = dma.vmem_to_hbm [thread:$0]  %s674, 256, %s672, %s655, 128, 128, 8
        $region64: #{tpu_custom_call.1} parent=43 // pred_fallthru
          _
        // Predicated region
        $region65: #{tpu_custom_call.1} parent=43 // pred_check
          %p680 = pneg %p209
        $region66: #{tpu_custom_call.1} parent=43 // pred_check_branch
          %682 = sbr.rel (%p680) target = $region68
        $region67: #{tpu_custom_call.1} parent=43 // pred_region
          %s683 = smul.u32 2, %s29
        $region68: #{tpu_custom_call.1} parent=43 // pred_fallthru
          _
      $region44: #{tpu_custom_call.1} parent=5 // pred_fallthru
        _
      %p684 = scmp.le.s32.totalorder 2, %s24
      // Predicated region
      $region69: #{tpu_custom_call.1} parent=5 // pred_check
        %p685 = pneg %p684
      $region70: #{tpu_custom_call.1} parent=5 // pred_check_branch
        %687 = sbr.rel (%p685) target = $region72
      $region71: #{tpu_custom_call.1} parent=5 // pred_region
        %s688 = ssub.s32 %s24, 2
        // Predicated region
        $region73: #{tpu_custom_call.1} parent=71 // pred_check
          %p689 = pneg %p189
        $region74: #{tpu_custom_call.1} parent=71 // pred_check_branch
          %691 = sbr.rel (%p689) target = $region76
        $region75: #{tpu_custom_call.1} parent=71 // pred_region
          %s692 = sand.u32 %s174, 1
          %s693 = scalar_lea.sflag [#allocation4], %s692
          %s694 = sand.u32 %s174, 1
          %s695 = smul.addr %s694, 16
          %s696 = scalar_lea.vmem [#allocation10], %s695
          %697 = dma.done %s693, 256
        $region76: #{tpu_custom_call.1} parent=71 // pred_fallthru
          _
        // Predicated region
        $region77: #{tpu_custom_call.1} parent=71 // pred_check
          %p698 = pneg %p215
        $region78: #{tpu_custom_call.1} parent=71 // pred_check_branch
          %700 = sbr.rel (%p698) target = $region80
        $region79: #{tpu_custom_call.1} parent=71 // pred_region
          %s701 = smul.u32 2, %s30
          %p702 = scmp.lt.s32.totalorder %s701, 3
          %s703 = scalar_select %p702, %s701, 3
          %s704 = smul.addr %s703, 8
          %s705 = scalar_lea.vmem %s7, %s704
        $region80: #{tpu_custom_call.1} parent=71 // pred_fallthru
          _
      $region72: #{tpu_custom_call.1} parent=5 // pred_fallthru
        _
    $region6: #{tpu_custom_call.1} parent=1 // loop_footer
      %s28 = sadd.s32 1, %s24
    $region7: #{tpu_custom_call.1} parent=1 // loop_footer_branch
      %23 = sbr.rel target = $region3
    $region8: #{tpu_custom_call.1} parent=1 // loop_exit
      _
    %706 = vsyncpa [#allocation3], 1
    %s707 = scalar_lea.sflag [#allocation3], 1
    %708 = vsyncpa %s707, 1
    %709 = vsyncpa [#allocation6], 1
    %s710 = scalar_lea.sflag [#allocation6], 1
    %711 = vsyncpa %s710, 1
    %712 = vsyncpa [#allocation9], 1
    %713 = vsyncpa [#allocation4], 1
    %s714 = scalar_lea.sflag [#allocation4], 1
    %715 = vsyncpa %s714, 1

</llo_original>
